<compile_context>
chip_gen: v7x
topology: tpu7x:2x2x1
jax: 0.10.0
libtpu: 0.0.40
codegen_flags: <defaults>
</compile_context>

<pallas_src>
import functools

import jax
import jax.numpy as jnp
from jax.experimental import pallas as pl
from jax.experimental.pallas import tpu as pltpu


def _policy_kernel(n_actions, obs_ref, table_ref, out_ref):
    n = out_ref.shape[0]
    a = n_actions
    packed_w = out_ref.shape[1]

    # --- gather table rows by obs, accumulated in registers -----------------
    # obs is in SMEM; the loop is fully unrolled (static trip count), only the
    # sublane start of each dynamic slice is data-dependent.
    rows = jnp.concatenate(
        [table_ref[pl.ds(obs_ref[i], 1), :] for i in range(n)], axis=0
    )                                                   # [N, A+1]
    logits = rows[:, :a]                                # [N, A]
    value = rows[:, a:a + 1]                            # [N, 1]

    # --- softmax(logits, dim=1) with approx reciprocal (EUP) ----------------
    m = jnp.max(logits, axis=1, keepdims=True)
    e = jnp.exp(logits - m)
    denom = jnp.sum(e, axis=1, keepdims=True)
    policy = e * pl.reciprocal(denom, approx=True)      # [N, A]

    # --- pack everything and write one unmasked lane-dense store ------------
    pad = jnp.zeros((n, packed_w - (2 * a + 1)), jnp.float32)
    out_ref[...] = jnp.concatenate([logits, policy, value, pad], axis=-1)


def hill_climbing_policy_forward(obs, w1, b1, wp, bp, wv, bv):
    """obs: int [N]; weights stored as [in, out]. Returns (logits, policy, value)."""
    n = obs.shape[0]
    n_obs, n_hidden = w1.shape
    n_actions = wp.shape[1]

    # Host-side (jit-fusable) precompute: the network output is a pure
    # function of the integer obs, so build the full obs -> [logits | value]
    # table once.  table[o] = relu(W1[o] + b1) @ [Wp | Wv] + [bp | bv].
    hi = jax.lax.Precision.HIGHEST
    h_table = jnp.maximum(w1 + b1[None, :], 0.0)               # [n_obs, H]
    wpv = jnp.concatenate([wp, wv], axis=1)                    # [H, A+1]
    bpv = jnp.concatenate([bp, bv])                            # [A+1]
    table = jnp.dot(h_table, wpv, precision=hi) + bpv[None, :]  # [n_obs, A+1]

    # Clamp obs: VMEM OOB dynamic-slice reads are not bounds-checked at
    # runtime, so out-of-range observations would silently read garbage.
    obs_i32 = jnp.clip(obs.astype(jnp.int32), 0, n_obs - 1)

    # Lane-dense packed output: [logits | policy | value | zero padding].
    packed_w = max(128, pl.cdiv(2 * n_actions + 1, 128) * 128)
    assert 2 * n_actions + 1 <= packed_w

    out = pl.pallas_call(
        functools.partial(_policy_kernel, n_actions),
        out_shape=jax.ShapeDtypeStruct((n, packed_w), jnp.float32),
        in_specs=[
            pl.BlockSpec(memory_space=pltpu.MemorySpace.SMEM),   # obs (scalars)
            pl.BlockSpec(memory_space=pltpu.MemorySpace.VMEM),   # obs->output table
        ],
        out_specs=pl.BlockSpec(memory_space=pltpu.MemorySpace.VMEM),
    )(obs_i32, table)

    logits = out[:, :n_actions]
    policy = out[:, n_actions:2 * n_actions]
    value = out[:, 2 * n_actions]                               # == .view(-1)
    return logits, policy, value


if __name__ == "__main__":
    # Small shapes consistent with the module: n_obs=16, n_hidden=32,
    # n_actions=8, batch N=8.
    n_obs, n_hidden, n_actions, batch = 16, 32, 8, 8

    key = jax.random.PRNGKey(0)
    k1, k2, k3, k4, k5, k6, k7 = jax.random.split(key, 7)

    # Deterministic synthetic parameters (PyTorch Linear weights stored
    # transposed as [in, out] so the math is x @ W + b).
    w1 = jax.random.normal(k1, (n_obs, n_hidden), jnp.float32) * 0.1
    b1 = jax.random.normal(k2, (n_hidden,), jnp.float32) * 0.1
    wp = jax.random.normal(k3, (n_hidden, n_actions), jnp.float32) * 0.1
    bp = jax.random.normal(k4, (n_actions,), jnp.float32) * 0.1
    wv = jax.random.normal(k5, (n_hidden, 1), jnp.float32) * 0.1
    bv = jax.random.normal(k6, (1,), jnp.float32) * 0.1

    # Integer observations in [0, n_obs)
    obs = jax.random.randint(k7, (batch,), 0, n_obs, jnp.int32)

    logits, policy, value = hill_climbing_policy_forward(
        obs, w1, b1, wp, bp, wv, bv)
    jax.block_until_ready((logits, policy, value))

    # Pure-JAX reference (highest-precision f32), mirrors the PyTorch forward.
    hi = jax.lax.Precision.HIGHEST
    oh = jax.nn.one_hot(obs, n_obs, dtype=jnp.float32)
    h = jax.nn.relu(jnp.dot(oh, w1, precision=hi) + b1)
    ref_logits = jnp.dot(h, wp, precision=hi) + bp
    ref_policy = jax.nn.softmax(ref_logits, axis=1)
    ref_value = (jnp.dot(h, wv, precision=hi) + bv).reshape(-1)

    assert logits.shape == (batch, n_actions)
    assert policy.shape == (batch, n_actions)
    assert value.shape == (batch,)
    assert jnp.allclose(logits, ref_logits, atol=1e-4)
    # approx reciprocal in the softmax -> slightly looser (still tight) bound
    assert jnp.allclose(policy, ref_policy, atol=2e-3)
    assert jnp.allclose(value, ref_value, atol=1e-4)

    print("KERNEL_OK")
</pallas_src>

<mosaic_0001>
module attributes {stable_mosaic.version = 11 : i64} {
  func.func @_policy_kernel(%arg0: memref<8xi32, #tpu.memory_space<smem>>, %arg1: memref<16x9xf32, #tpu.memory_space<vmem>>, %arg2: memref<8x128xf32, #tpu.memory_space<vmem>>) attributes {dimension_semantics = [], scalar_prefetch = 0 : i64, scratch_operands = 0 : i64, tpu.core_type = #tpu.core_type<tc>} {
    %c0 = arith.constant 0 : index
    %0 = memref.load %arg0[%c0] : memref<8xi32, #tpu.memory_space<smem>>
    %1 = arith.index_cast %0 : i32 to index
    %c0_0 = arith.constant 0 : index
    %2 = vector.load %arg1[%1, %c0_0] : memref<16x9xf32, #tpu.memory_space<vmem>>, vector<1x9xf32>
    %c1 = arith.constant 1 : index
    %3 = memref.load %arg0[%c1] : memref<8xi32, #tpu.memory_space<smem>>
    %4 = arith.index_cast %3 : i32 to index
    %c0_1 = arith.constant 0 : index
    %5 = vector.load %arg1[%4, %c0_1] : memref<16x9xf32, #tpu.memory_space<vmem>>, vector<1x9xf32>
    %c2 = arith.constant 2 : index
    %6 = memref.load %arg0[%c2] : memref<8xi32, #tpu.memory_space<smem>>
    %7 = arith.index_cast %6 : i32 to index
    %c0_2 = arith.constant 0 : index
    %8 = vector.load %arg1[%7, %c0_2] : memref<16x9xf32, #tpu.memory_space<vmem>>, vector<1x9xf32>
    %c3 = arith.constant 3 : index
    %9 = memref.load %arg0[%c3] : memref<8xi32, #tpu.memory_space<smem>>
    %10 = arith.index_cast %9 : i32 to index
    %c0_3 = arith.constant 0 : index
    %11 = vector.load %arg1[%10, %c0_3] : memref<16x9xf32, #tpu.memory_space<vmem>>, vector<1x9xf32>
    %c4 = arith.constant 4 : index
    %12 = memref.load %arg0[%c4] : memref<8xi32, #tpu.memory_space<smem>>
    %13 = arith.index_cast %12 : i32 to index
    %c0_4 = arith.constant 0 : index
    %14 = vector.load %arg1[%13, %c0_4] : memref<16x9xf32, #tpu.memory_space<vmem>>, vector<1x9xf32>
    %c5 = arith.constant 5 : index
    %15 = memref.load %arg0[%c5] : memref<8xi32, #tpu.memory_space<smem>>
    %16 = arith.index_cast %15 : i32 to index
    %c0_5 = arith.constant 0 : index
    %17 = vector.load %arg1[%16, %c0_5] : memref<16x9xf32, #tpu.memory_space<vmem>>, vector<1x9xf32>
    %c6 = arith.constant 6 : index
    %18 = memref.load %arg0[%c6] : memref<8xi32, #tpu.memory_space<smem>>
    %19 = arith.index_cast %18 : i32 to index
    %c0_6 = arith.constant 0 : index
    %20 = vector.load %arg1[%19, %c0_6] : memref<16x9xf32, #tpu.memory_space<vmem>>, vector<1x9xf32>
    %c7 = arith.constant 7 : index
    %21 = memref.load %arg0[%c7] : memref<8xi32, #tpu.memory_space<smem>>
    %22 = arith.index_cast %21 : i32 to index
    %c0_7 = arith.constant 0 : index
    %23 = vector.load %arg1[%22, %c0_7] : memref<16x9xf32, #tpu.memory_space<vmem>>, vector<1x9xf32>
    %24 = tpu.concatenate %2, %5, %8, %11, %14, %17, %20, %23 in 0 : vector<1x9xf32>, vector<1x9xf32>, vector<1x9xf32>, vector<1x9xf32>, vector<1x9xf32>, vector<1x9xf32>, vector<1x9xf32>, vector<1x9xf32> -> vector<8x9xf32>
    %25 = vector.extract_strided_slice %24 {offsets = [0, 0], sizes = [8, 8], strides = [1, 1]} : vector<8x9xf32> to vector<8x8xf32>
    %26 = vector.extract_strided_slice %24 {offsets = [0, 8], sizes = [8, 1], strides = [1, 1]} : vector<8x9xf32> to vector<8x1xf32>
    %cst = arith.constant dense<0xFF800000> : vector<8xf32>
    %27 = vector.multi_reduction <maximumf>, %25, %cst [1] : vector<8x8xf32> to vector<8xf32>
    %28 = vector.shape_cast %27 : vector<8xf32> to vector<8x1xf32>
    %29 = vector.broadcast %28 : vector<8x1xf32> to vector<8x8xf32>
    %30 = arith.subf %25, %29 : vector<8x8xf32>
    %31 = math.exp %30 : vector<8x8xf32>
    %cst_8 = arith.constant dense<0.000000e+00> : vector<8xf32>
    %32 = vector.multi_reduction <add>, %31, %cst_8 [1] : vector<8x8xf32> to vector<8xf32>
    %33 = vector.shape_cast %32 : vector<8xf32> to vector<8x1xf32>
    %34 = tpu.reciprocal %33 {approx = true} : vector<8x1xf32> -> vector<8x1xf32>
    %35 = vector.broadcast %34 : vector<8x1xf32> to vector<8x8xf32>
    %36 = arith.mulf %31, %35 : vector<8x8xf32>
    %cst_9 = arith.constant 0.000000e+00 : f32
    %37 = vector.broadcast %cst_9 : f32 to vector<8x111xf32>
    %38 = tpu.concatenate %25, %36, %26, %37 in 1 : vector<8x8xf32>, vector<8x8xf32>, vector<8x1xf32>, vector<8x111xf32> -> vector<8x128xf32>
    %c0_10 = arith.constant 0 : index
    %c0_11 = arith.constant 0 : index
    %39 = vector.load %arg2[%c0_10, %c0_11] : memref<8x128xf32, #tpu.memory_space<vmem>>, vector<8x128xf32>
    tpu.vector_store %arg2[%c0_10, %c0_11], %38 {strides = array<i32>} : memref<8x128xf32, #tpu.memory_space<vmem>>, vector<8x128xf32>,
    return
  }
}

</mosaic_0001>

<llo_original>
// kernel: tpu_custom_call.1
$region0: #{tpu_custom_call.1}
  #allocation0 [shape = 'u32[]', space=smem, size = 0x4, offset = 0x4, fixed_abs, tag = 'smem constant byte address 0x4 - core index']
  #allocation1 [shape = 'u32[144,128]{1,0:T(1,128)}', space=vmem, size = 0x12000, scoped, tag = 'internal scratch']
  %s0 = inlined_call_operand.hbm [shape: s32[8], index: 0, kind: input, shape index: {}]
  %s1 = inlined_call_operand.hbm [shape: f32[16,9], index: 1, kind: input, shape index: {}]
  %s2 = inlined_call_operand.hbm [shape: f32[8,128], index: 2, kind: output, shape index: {}]
  %s3 = sld [smem:[#allocation0]]
  $region26: #{tpu_custom_call.1} parent=0
    _
  %s5 = ssub.s32 1, %s3
  %s6 = scalar_select 0, %s5, %s3
  $region1: #{tpu_custom_call.1} parent=0
    #allocation2 [shape = 'u8[512]{0}', space=smem, size = 0x200, scoped, tag = 'input window, operand 0, single buffered']
    #allocation3 [shape = 's32[1]{0}', space=sflag, size = 0x4, scoped, tag = 'scoped memory for tpu_custom_call.1']
    #allocation4 [shape = 's32[1]{0}', space=sflag, size = 0x4, scoped, tag = 'scoped memory for tpu_custom_call.1']
    #allocation5 [shape = 's32[1]{0}', space=sflag, size = 0x4, scoped, tag = 'scoped memory for tpu_custom_call.1']
    #allocation6 [shape = 'u8[8192]{0}', space=vmem, size = 0x2000, scoped, tag = 'input window, operand 1, single buffered']
    #allocation7 [shape = 'u8[4096]{0}', space=vmem, size = 0x1000, scoped, tag = 'output window, operand 0, single buffered']
    %7 = vsyncpa [#allocation5], 0
    %8 = vsyncpa [#allocation3], 0
    %9 = vsyncpa [#allocation4], 0
    // Predicated region
    $region2: #{tpu_custom_call.1} parent=1 // pred_check
      _
    $region3: #{tpu_custom_call.1} parent=1 // pred_check_branch
      %11 = sbr.rel (0) target = $region5
    $region4: #{tpu_custom_call.1} parent=1 // pred_region
      %s13 = ssub.s32 16, 16
      %14 = vsyncadd [#allocation5], %s13
      %17 = dma.hbm_to_smem %s0, 16, [#allocation2], [#allocation5]
    $region5: #{tpu_custom_call.1} parent=1 // pred_fallthru
      _
    // Predicated region
    $region6: #{tpu_custom_call.1} parent=1 // pred_check
      _
    $region7: #{tpu_custom_call.1} parent=1 // pred_check_branch
      %19 = sbr.rel (0) target = $region9
    $region8: #{tpu_custom_call.1} parent=1 // pred_region
      %s21 = ssub.s32 256, 256
      %22 = vsyncadd [#allocation3], %s21
      %s23 = sshll.u32 [#allocation6], 4
      %s24 = int_to_ptr.vmem [resolvable:$true] %s23
      %29 = dma.hbm_to_vmem [thread:$0]  %s1, 256, %s24, [#allocation3], 128, 128, 8
    $region9: #{tpu_custom_call.1} parent=1 // pred_fallthru
      _
    // Predicated region
    $region10: #{tpu_custom_call.1} parent=1 // pred_check
      _
    $region11: #{tpu_custom_call.1} parent=1 // pred_check_branch
      %31 = sbr.rel (0) target = $region13
    $region12: #{tpu_custom_call.1} parent=1 // pred_region
      %32 = dma.done [#allocation5], 16
    $region13: #{tpu_custom_call.1} parent=1 // pred_fallthru
      _
    // Predicated region
    $region14: #{tpu_custom_call.1} parent=1 // pred_check
      _
    $region15: #{tpu_custom_call.1} parent=1 // pred_check_branch
      %34 = sbr.rel (0) target = $region17
    $region16: #{tpu_custom_call.1} parent=1 // pred_region
      %35 = dma.done [#allocation3], 256
    $region17: #{tpu_custom_call.1} parent=1 // pred_fallthru
      _
    %36 = sfence
    %s37 = sld [smem:[#allocation2]]
    %s38 = scalar_lea.vmem [#allocation6], %s37
    %v39 = vld [vmem:[%s38] sm:$0x1]
    %s40 = sld [smem:[#allocation2 + $0x1]]
    %s41 = scalar_lea.vmem [#allocation6], %s40
    %v42 = vld [vmem:[%s41] sm:$0x1]
    %s43 = sld [smem:[#allocation2 + $0x2]]
    %s44 = scalar_lea.vmem [#allocation6], %s43
    %v45 = vld [vmem:[%s44] sm:$0x1]
    %s46 = sld [smem:[#allocation2 + $0x3]]
    %s47 = scalar_lea.vmem [#allocation6], %s46
    %v48 = vld [vmem:[%s47] sm:$0x1]
    %s49 = sld [smem:[#allocation2 + $0x4]]
    %s50 = scalar_lea.vmem [#allocation6], %s49
    %v51 = vld [vmem:[%s50] sm:$0x1]
    %s52 = sld [smem:[#allocation2 + $0x5]]
    %s53 = scalar_lea.vmem [#allocation6], %s52
    %v54 = vld [vmem:[%s53] sm:$0x1]
    %s55 = sld [smem:[#allocation2 + $0x6]]
    %s56 = scalar_lea.vmem [#allocation6], %s55
    %v57 = vld [vmem:[%s56] sm:$0x1]
    %s58 = sld [smem:[#allocation2 + $0x7]]
    %s59 = scalar_lea.vmem [#allocation6], %s58
    %v60 = vld [vmem:[%s59] sm:$0x1]
    %v62 = vrot.slane %v42, 7
    %v65 = vrot.slane %v45, 6
    %v68 = vrot.slane %v48, 5
    %v71 = vrot.slane %v51, 4
    %v74 = vrot.slane %v54, 3
    %v77 = vrot.slane %v57, 2
    %v80 = vrot.slane %v60, 1
    %vm82 = vcmask 1040384
    %v83 = vsel %vm82, %v39, %v62
    %vm84 = vcmask 1041408
    %v85 = vsel %vm84, %v83, %v65
    %vm86 = vcmask 1042432
    %v87 = vsel %vm86, %v85, %v68
    %vm88 = vcmask 1043456
    %v89 = vsel %vm88, %v87, %v71
    %vm90 = vcmask 1044480
    %v91 = vsel %vm90, %v89, %v74
    %vm92 = vcmask 1045504
    %v93 = vsel %vm92, %v91, %v77
    %vm94 = vcmask 1046528
    %v95 = vsel %vm94, %v93, %v80
    %vm96 = vcmask 64512
    %v97 = vsel %vm96, %v95, -inf
    %98 = vmax.xlane.f32.xlu0 %v97
    %v99 = vpop.xlane.xlu0 %98
    %v100 = vsub.f32 %v95, %v99
    %v101 = vmul.f32 %v100, 1.442695
    %v102 = vpow.pop %v101
    %v103 = vsel %vm96, %v102, 0.0
    %104 = vadd.xlane.f32.xlu0 %v103
    %v105 = vpop.xlane.xlu0 %104
    %v106 = vrcp.pop %v105
    %v107 = vmul.f32 %v102, %v106
    %109 = vrot.lane.b32.xlu0 %v107, 8
    %v110 = vpop.permute.xlu0 %109
    %113 = vrot.lane.b32.xlu0 %v95, 8
    %v114 = vpop.permute.xlu0 %113
    %v116 = vsel %vm96, %v95, %v110
    %vm117 = vcmask 130048
    %v118 = vsel %vm117, %v116, %v114
    %vm119 = vcmask 138240
    %v120 = vsel %vm119, %v118, 0.0
    %121 = vst [vmem:[#allocation7] sm:$0xff] %v120
    // Predicated region
    $region18: #{tpu_custom_call.1} parent=1 // pred_check
      _
    $region19: #{tpu_custom_call.1} parent=1 // pred_check_branch
      %123 = sbr.rel (0) target = $region21
    $region20: #{tpu_custom_call.1} parent=1 // pred_region
      %s125 = ssub.s32 128, 128
      %126 = vsyncadd [#allocation4], %s125
      %s128 = sshll.u32 [#allocation7], 4
      %s129 = int_to_ptr.vmem [resolvable:$true] %s128
      %131 = dma.vmem_to_hbm [thread:$0]  %s129, 128, %s2, [#allocation4]
    $region21: #{tpu_custom_call.1} parent=1 // pred_fallthru
      _
    // Predicated region
    $region22: #{tpu_custom_call.1} parent=1 // pred_check
      _
    $region23: #{tpu_custom_call.1} parent=1 // pred_check_branch
      %133 = sbr.rel (0) target = $region25
    $region24: #{tpu_custom_call.1} parent=1 // pred_region
      %134 = dma.done [#allocation4], 128
    $region25: #{tpu_custom_call.1} parent=1 // pred_fallthru
      _
    %135 = vsyncpa [#allocation3], 1
    %136 = vsyncpa [#allocation4], 1
    %137 = vsyncpa [#allocation5], 1

</llo_original>
